<compile_context>
chip_gen: v6e
topology: v6e:2x2x1
jax: 0.10.0
libtpu: 0.0.40
codegen_flags: <defaults>
</compile_context>

<pallas_src>
import math

import jax
import jax.numpy as jnp
from jax.experimental import pallas as pl
from jax.experimental.pallas import tpu as pltpu


def _round_up(x, m):
    return ((x + m - 1) // m) * m


def _bilinear_weight_matrix(in_size, out_size, scale_factor):
    """Interpolation matrix (out_size, in_size) matching PyTorch upsample_bilinear2d
    with align_corners=False and an explicit scale_factor (ratio = 1/scale). fp32."""
    ratio = 1.0 / float(scale_factor)
    dst = jnp.arange(out_size, dtype=jnp.float32)
    src = jnp.maximum(ratio * (dst + 0.5) - 0.5, 0.0)      # area_pixel source index
    i0 = jnp.minimum(jnp.floor(src).astype(jnp.int32), in_size - 1)
    i1 = jnp.minimum(i0 + 1, in_size - 1)
    w1 = src - i0.astype(jnp.float32)
    w0 = 1.0 - w1
    eye = jnp.eye(in_size, dtype=jnp.float32)
    return w0[:, None] * eye[i0] + w1[:, None] * eye[i1]   # (out_size, in_size)


def _interp_kernel(x_ref, lh_ref, lwt_ref, o_ref):
    # x_ref  : (B, H_in, W_in)        batch of channel slabs
    # lh_ref : (H_out, H_in)          row (H) interpolation weights, fp32
    # lwt_ref: (W_in, W_out_pad)      pre-transposed, lane-padded col (W) weights, fp32
    # o_ref  : (B, H_out, W_out_pad)
    B, H_in, W_in = x_ref.shape
    H_out = lh_ref.shape[0]
    W_out_p = lwt_ref.shape[1]

    x = x_ref[...].astype(jnp.float32)

    # W-interp: one big MXU matmul, flattening (B, H_in) into the M dimension
    # (merging leading dims is layout-free since W is the lane dim).
    tmp = jnp.dot(x.reshape(B * H_in, W_in), lwt_ref[...],
                  preferred_element_type=jnp.float32)            # (B*H_in, W_out_p)
    tmp = tmp.reshape(B, H_in, W_out_p)

    # H-interp: batched matmul over the slab dim; lane dim (W_out_p) is 128-dense.
    lh_b = jnp.broadcast_to(lh_ref[...], (B, H_out, H_in))
    out = jnp.einsum("boh,bhw->bow", lh_b, tmp,
                     preferred_element_type=jnp.float32)         # (B, H_out, W_out_p)

    o_ref[...] = out.astype(o_ref.dtype)


def _choose_block_batch(nc, in_slab_bytes, out_slab_bytes, temp_slab_bytes,
                        fixed_bytes, budget_bytes):
    """Largest divisor B of nc that fits the VMEM budget while keeping >= 2 grid
    steps (so both v7x TensorCores receive parallel work)."""
    cap = nc if nc <= 1 else max(1, nc // 2)
    best = 1
    for b in range(1, cap + 1):
        if nc % b:
            continue
        need = fixed_bytes + 2 * b * (in_slab_bytes + out_slab_bytes) + b * temp_slab_bytes
        if need <= budget_bytes:
            best = b
    return best


def interpolate_bilinear(x, scale_factor):
    """Equivalent of Interpolate(scale_factor)(x) for NCHW float inputs."""
    N, C, H, W = x.shape
    # TODO(synk): for non-representable scale factors PyTorch's output-size rule can
    # differ by one at exact integer boundaries; exact for integral scale factors.
    H_out = int(math.floor(H * scale_factor))
    W_out = int(math.floor(W * scale_factor))
    NC = N * C

    # Lane-dense output: pad W_out to a multiple of 128 (extra columns are exact zeros
    # from zero weight columns and are sliced off below) -> unmasked vector stores.
    W_out_p = _round_up(W_out, 128)

    lh = _bilinear_weight_matrix(H, H_out, scale_factor)                    # (H_out, H)
    lw = _bilinear_weight_matrix(W, W_out, scale_factor)                    # (W_out, W)
    lwt = jnp.zeros((W, W_out_p), jnp.float32).at[:, :W_out].set(lw.T)      # (W, W_out_p)

    itemsize = jnp.dtype(x.dtype).itemsize
    in_slab = H * W * itemsize
    out_slab = H_out * W_out_p * itemsize
    # fp32 in-kernel temporaries per slab: x cast, tmp, broadcast Lh, fp32 out.
    temp_slab = 4 * (H * W + H * W_out_p + H_out * H + H_out * W_out_p)
    fixed = 2 * 4 * (H_out * H + W * W_out_p)        # double-buffered weight blocks

    vmem_limit_bytes = 48 * 1024 * 1024              # safe on v5e/v6e/v7x scoped VMEM
    budget_bytes = 36 * 1024 * 1024                  # leave headroom under the limit
    B = _choose_block_batch(NC, in_slab, out_slab, temp_slab, fixed, budget_bytes)

    xf = x.reshape(NC, H, W)

    out = pl.pallas_call(
        _interp_kernel,
        out_shape=jax.ShapeDtypeStruct((NC, H_out, W_out_p), x.dtype),
        grid=(NC // B,),
        in_specs=[
            pl.BlockSpec((B, H, W), lambda i: (i, 0, 0)),
            pl.BlockSpec((H_out, H), lambda i: (0, 0)),
            pl.BlockSpec((W, W_out_p), lambda i: (0, 0)),
        ],
        out_specs=pl.BlockSpec((B, H_out, W_out_p), lambda i: (i, 0, 0)),
        compiler_params=pltpu.CompilerParams(
            dimension_semantics=("parallel",),
            vmem_limit_bytes=vmem_limit_bytes,
        ),
    )(xf, lh, lwt)

    if W_out_p != W_out:
        out = out[:, :, :W_out]
    return out.reshape(N, C, H_out, W_out)


def _reference_bilinear(x, scale_factor):
    """Independent gather+lerp reference (pure JAX, PyTorch align_corners=False)."""
    N, C, H, W = x.shape
    H_out = int(math.floor(H * scale_factor))
    W_out = int(math.floor(W * scale_factor))
    ratio = 1.0 / float(scale_factor)

    def src_idx(out_size, in_size):
        d = jnp.arange(out_size, dtype=jnp.float32)
        s = jnp.maximum(ratio * (d + 0.5) - 0.5, 0.0)
        i0 = jnp.minimum(jnp.floor(s).astype(jnp.int32), in_size - 1)
        i1 = jnp.minimum(i0 + 1, in_size - 1)
        return i0, i1, s - i0.astype(jnp.float32)

    h0, h1, wh = src_idx(H_out, H)
    w0, w1, ww = src_idx(W_out, W)
    xr = x.astype(jnp.float32)
    top = (xr[:, :, h0, :] * (1.0 - wh)[None, None, :, None]
           + xr[:, :, h1, :] * wh[None, None, :, None])
    out = top[:, :, :, w0] * (1.0 - ww) + top[:, :, :, w1] * ww
    return out.astype(x.dtype)


if __name__ == "__main__":
    key = jax.random.PRNGKey(0)
    x = jax.random.normal(key, (2, 4, 16, 16), dtype=jnp.float32)

    scale_factor = 2
    y = interpolate_bilinear(x, scale_factor)
    jax.block_until_ready(y)

    assert y.shape == (2, 4, 32, 32), y.shape
    assert y.dtype == x.dtype

    y_ref = _reference_bilinear(x, scale_factor)
    assert jnp.allclose(y, y_ref, atol=1e-4, rtol=1e-4), float(jnp.max(jnp.abs(y - y_ref)))

    print("KERNEL_OK")
</pallas_src>

<mosaic_0001>
module attributes {stable_mosaic.version = 11 : i64} {
  func.func @_interp_kernel(%arg0: i32, %arg1: memref<4x16x16xf32, #tpu.memory_space<vmem>>, %arg2: memref<32x16xf32, #tpu.memory_space<vmem>>, %arg3: memref<16x128xf32, #tpu.memory_space<vmem>>, %arg4: memref<4x32x128xf32, #tpu.memory_space<vmem>>) attributes {dimension_semantics = [#tpu.dimension_semantics<parallel>], iteration_bounds = array<i64: 2>, scalar_prefetch = 0 : i64, scratch_operands = 0 : i64, tpu.core_type = #tpu.core_type<tc>, window_params = [{transform_indices = @transform_0, window_bounds = array<i64: 4, 16, 16>}, {pipeline_mode = #tpu.pipeline_mode<synchronous>, transform_indices = @transform_1, window_bounds = array<i64: 32, 16>}, {pipeline_mode = #tpu.pipeline_mode<synchronous>, transform_indices = @transform_2, window_bounds = array<i64: 16, 128>}, {transform_indices = @transform_3, window_bounds = array<i64: 4, 32, 128>}]} {
    %c0 = arith.constant 0 : index
    %c0_0 = arith.constant 0 : index
    %c0_1 = arith.constant 0 : index
    %0 = vector.load %arg1[%c0, %c0_0, %c0_1] : memref<4x16x16xf32, #tpu.memory_space<vmem>>, vector<4x16x16xf32>
    %1 = vector.shape_cast %0 : vector<4x16x16xf32> to vector<64x16xf32>
    %c0_2 = arith.constant 0 : index
    %c0_3 = arith.constant 0 : index
    %2 = vector.load %arg3[%c0_2, %c0_3] : memref<16x128xf32, #tpu.memory_space<vmem>>, vector<16x128xf32>
    %cst = arith.constant dense<0.000000e+00> : vector<64x128xf32>
    %3 = tpu.matmul %1, %2, %cst {dimension_numbers = #tpu.dot_dimension_numbers<[1], [0], [0], [1], [0, 0, 1, 1], [], []>} : vector<64x16xf32>, vector<16x128xf32>, vector<64x128xf32> -> vector<64x128xf32>
    %4 = vector.shape_cast %3 : vector<64x128xf32> to vector<4x16x128xf32>
    %c0_4 = arith.constant 0 : index
    %c0_5 = arith.constant 0 : index
    %5 = vector.load %arg2[%c0_4, %c0_5] : memref<32x16xf32, #tpu.memory_space<vmem>>, vector<32x16xf32>
    %6 = vector.shape_cast %5 : vector<32x16xf32> to vector<1x32x16xf32>
    %7 = vector.broadcast %6 : vector<1x32x16xf32> to vector<4x32x16xf32>
    "tpu.trace_start"() <{level = 10 : i32, message = "boh,bhw->bow"}> : () -> ()
    %cst_6 = arith.constant dense<0.000000e+00> : vector<4x32x128xf32>
    %8 = tpu.matmul %7, %4, %cst_6 {dimension_numbers = #tpu.dot_dimension_numbers<[2], [1], [1], [2], [0, 0, 0, 1, 1, 2], [0], [0]>} : vector<4x32x16xf32>, vector<4x16x128xf32>, vector<4x32x128xf32> -> vector<4x32x128xf32>
    "tpu.trace_stop"() : () -> ()
    %c0_7 = arith.constant 0 : index
    %c0_8 = arith.constant 0 : index
    %c0_9 = arith.constant 0 : index
    %9 = vector.load %arg4[%c0_7, %c0_8, %c0_9] : memref<4x32x128xf32, #tpu.memory_space<vmem>>, vector<4x32x128xf32>
    tpu.vector_store %arg4[%c0_7, %c0_8, %c0_9], %8 {strides = array<i32>} : memref<4x32x128xf32, #tpu.memory_space<vmem>>, vector<4x32x128xf32>,
    return
  }
  func.func @transform_0(%arg0: i32) -> (i32, i32, i32) {
    %c0_i32 = arith.constant 0 : i32
    %c0_i32_0 = arith.constant 0 : i32
    %c0_i32_1 = arith.constant 0 : i32
    return %arg0, %c0_i32, %c0_i32_0 : i32, i32, i32
  }
  func.func @transform_1(%arg0: i32) -> (i32, i32) {
    %c0_i32 = arith.constant 0 : i32
    %c0_i32_0 = arith.constant 0 : i32
    %c0_i32_1 = arith.constant 0 : i32
    return %c0_i32, %c0_i32_0 : i32, i32
  }
  func.func @transform_2(%arg0: i32) -> (i32, i32) {
    %c0_i32 = arith.constant 0 : i32
    %c0_i32_0 = arith.constant 0 : i32
    %c0_i32_1 = arith.constant 0 : i32
    return %c0_i32, %c0_i32_0 : i32, i32
  }
  func.func @transform_3(%arg0: i32) -> (i32, i32, i32) {
    %c0_i32 = arith.constant 0 : i32
    %c0_i32_0 = arith.constant 0 : i32
    %c0_i32_1 = arith.constant 0 : i32
    return %arg0, %c0_i32, %c0_i32_0 : i32, i32, i32
  }
}

</mosaic_0001>

<llo_original>
// kernel: tpu_custom_call.1
$region0: #{tpu_custom_call.1}
  #allocation0 [shape = 'u32[]', space=smem, size = 0x4, offset = 0x4, fixed_abs, tag = 'smem constant byte address 0x4 - core index']
  #allocation1 [shape = 'u32[144,128]{1,0:T(1,128)}', space=vmem, size = 0x12000, scoped, tag = 'internal scratch']
  %s0 = inlined_call_operand.hbm [shape: f32[8,16,16], index: 0, kind: input, shape index: {}]
  %s1 = inlined_call_operand.vmem [shape: f32[32,16], index: 1, kind: input, shape index: {}]
  %s2 = inlined_call_operand.vmem [shape: f32[16,128], index: 2, kind: input, shape index: {}]
  %s3 = inlined_call_operand.hbm [shape: f32[8,32,128], index: 3, kind: output, shape index: {}]
  %s4 = sld [smem:[#allocation0]]
  $region49: #{tpu_custom_call.1} parent=0
    _
  %s6 = ssub.s32 1, %s4
  %s7 = scalar_select 0, %s6, %s4
  $region1: #{tpu_custom_call.1} parent=0
    #allocation2 [shape = 'u8[65536]{0}', space=vmem, size = 0x10000, scoped, tag = 'input window, operand 0']
    #allocation3 [shape = 's32[2]{0}', space=sflag, size = 0x8, scoped, tag = 'scoped memory for tpu_custom_call.1']
    #allocation4 [shape = 's32[2]{0}', space=sflag, size = 0x8, scoped, tag = 'scoped memory for tpu_custom_call.1']
    #allocation5 [shape = 'u8[131072]{0}', space=vmem, size = 0x20000, scoped, tag = 'output window, operand 0']
    %8 = vsyncpa [#allocation3], 0
    %s9 = scalar_lea.sflag [#allocation3], 1
    %10 = vsyncpa %s9, 0
    %11 = vsyncpa [#allocation4], 0
    %s12 = scalar_lea.sflag [#allocation4], 1
    %13 = vsyncpa %s12, 0
    loop: start=0, step=1, limit=4
    $region2: #{tpu_custom_call.1} parent=1 // loop_pre_header
      _
    $region3: #{tpu_custom_call.1} parent=1 // loop_header
      %s15 = sphi 0, %s19
      %p16 = scmp.ge.s32.totalorder %s15, 4
      %s25 = sphi 0, %s27
      %s28 = sphi 0, %s25
      %s29 = sphi 0, %s28
      %s45 = sphi 0, %s29
      %s49 = sphi 0, %s49
      %s51 = sphi 0, %s49
      %s52 = sphi 0, %s51
      %s66 = sphi 0, %s52
      %s70 = sphi 0, %s70
      %s72 = sphi 0, %s70
      %s73 = sphi 0, %s72
      %s87 = sphi 0, %s73
      %s93 = sphi 0, %s95
      %s96 = sphi 0, %s93
      %s97 = sphi 0, %s96
      %s113 = sphi 0, %s97
    $region4: #{tpu_custom_call.1} parent=1 // loop_header_branch
      %18 = sbr.rel (%p16) target = $region8
    $region5: #{tpu_custom_call.1} parent=1 // loop_body
      %s20 = ssub.s32 %s15, 1
      %s21 = ssub.s32 %s15, 2
      %s22 = sadd.s32 %s15, 1
      %s23 = ssub.s32 %s15, %s22
      %p24 = scmp.eq.s32.totalorder %s23, 0
      %s26 = sadd.s32 %s25, 1
      %s27 = scalar_select %p24, %s25, %s26
      %p30 = pneg %p24
      %p31 = scmp.eq.s32.totalorder %s15, 1
      %p32 = por %p30, %p31
      %p33 = scmp.ne.s32.totalorder %s25, %s28
      %p34 = scmp.eq.s32.totalorder %s15, 0
      %p35 = por %p33, %p34
      %p36 = scmp.ne.s32.totalorder %s25, %s28
      %p37 = scmp.eq.s32.totalorder %s20, 1
      %p38 = por %p36, %p37
      %p39 = scmp.ne.s32.totalorder %s28, %s29
      %p40 = scmp.eq.s32.totalorder %s20, 0
      %p41 = por %p39, %p40
      %p42 = scmp.ne.s32.totalorder %s28, %s29
      %p43 = scmp.eq.s32.totalorder %s21, 1
      %p44 = por %p42, %p43
      %p46 = scmp.ne.s32.totalorder %s29, %s45
      %p47 = scmp.eq.s32.totalorder %s21, 0
      %p48 = por %p46, %p47
      %s50 = sadd.s32 %s49, 1
      %p53 = scmp.eq.s32.totalorder %s15, 1
      %p54 = scmp.ne.s32.totalorder %s49, %s51
      %p55 = scmp.eq.s32.totalorder %s15, 0
      %p56 = por %p54, %p55
      %p57 = scmp.ne.s32.totalorder %s49, %s51
      %p58 = scmp.eq.s32.totalorder %s20, 1
      %p59 = por %p57, %p58
      %p60 = scmp.ne.s32.totalorder %s51, %s52
      %p61 = scmp.eq.s32.totalorder %s20, 0
      %p62 = por %p60, %p61
      %p63 = scmp.ne.s32.totalorder %s51, %s52
      %p64 = scmp.eq.s32.totalorder %s21, 1
      %p65 = por %p63, %p64
      %p67 = scmp.ne.s32.totalorder %s52, %s66
      %p68 = scmp.eq.s32.totalorder %s21, 0
      %p69 = por %p67, %p68
      %s71 = sadd.s32 %s70, 1
      %p74 = scmp.eq.s32.totalorder %s15, 1
      %p75 = scmp.ne.s32.totalorder %s70, %s72
      %p76 = scmp.eq.s32.totalorder %s15, 0
      %p77 = por %p75, %p76
      %p78 = scmp.ne.s32.totalorder %s70, %s72
      %p79 = scmp.eq.s32.totalorder %s20, 1
      %p80 = por %p78, %p79
      %p81 = scmp.ne.s32.totalorder %s72, %s73
      %p82 = scmp.eq.s32.totalorder %s20, 0
      %p83 = por %p81, %p82
      %p84 = scmp.ne.s32.totalorder %s72, %s73
      %p85 = scmp.eq.s32.totalorder %s21, 1
      %p86 = por %p84, %p85
      %p88 = scmp.ne.s32.totalorder %s73, %s87
      %p89 = scmp.eq.s32.totalorder %s21, 0
      %p90 = por %p88, %p89
      %s91 = ssub.s32 %s15, %s22
      %p92 = scmp.eq.s32.totalorder %s91, 0
      %s94 = sadd.s32 %s93, 1
      %s95 = scalar_select %p92, %s93, %s94
      %p98 = pneg %p92
      %p99 = scmp.eq.s32.totalorder %s15, 1
      %p100 = por %p98, %p99
      %p101 = scmp.ne.s32.totalorder %s93, %s96
      %p102 = scmp.eq.s32.totalorder %s15, 0
      %p103 = por %p101, %p102
      %p104 = scmp.ne.s32.totalorder %s93, %s96
      %p105 = scmp.eq.s32.totalorder %s20, 1
      %p106 = por %p104, %p105
      %p107 = scmp.ne.s32.totalorder %s96, %s97
      %p108 = scmp.eq.s32.totalorder %s20, 0
      %p109 = por %p107, %p108
      %p110 = scmp.ne.s32.totalorder %s96, %s97
      %p111 = scmp.eq.s32.totalorder %s21, 1
      %p112 = por %p110, %p111
      %p114 = scmp.ne.s32.totalorder %s97, %s113
      %p115 = scmp.eq.s32.totalorder %s21, 0
      %p116 = por %p114, %p115
      %p117 = scmp.le.s32.totalorder 1, %s15
      %p118 = scmp.lt.s32.totalorder %s15, 3
      %p119 = pnand %p117, %p118
      %p120 = pneg %p119
      // Predicated region
      $region9: #{tpu_custom_call.1} parent=5 // pred_check
        _
      $region10: #{tpu_custom_call.1} parent=5 // pred_check_branch
        %122 = sbr.rel (%p119) target = $region12
      $region11: #{tpu_custom_call.1} parent=5 // pred_region
        %s123 = ssub.s32 %s15, 1
        // Predicated region
        $region13: #{tpu_custom_call.1} parent=11 // pred_check
          %p124 = pneg %p62
        $region14: #{tpu_custom_call.1} parent=11 // pred_check_branch
          %126 = sbr.rel (%p124) target = $region16
        $region15: #{tpu_custom_call.1} parent=11 // pred_region
          _
        $region16: #{tpu_custom_call.1} parent=11 // pred_fallthru
          _
        // Predicated region
        $region17: #{tpu_custom_call.1} parent=11 // pred_check
          %p127 = pneg %p83
        $region18: #{tpu_custom_call.1} parent=11 // pred_check_branch
          %129 = sbr.rel (%p127) target = $region20
        $region19: #{tpu_custom_call.1} parent=11 // pred_region
          _
        $region20: #{tpu_custom_call.1} parent=11 // pred_fallthru
          _
      $region12: #{tpu_custom_call.1} parent=5 // pred_fallthru
        _
      %p130 = scmp.lt.s32.totalorder %s15, 2
      // Predicated region
      $region21: #{tpu_custom_call.1} parent=5 // pred_check
        %p131 = pneg %p130
      $region22: #{tpu_custom_call.1} parent=5 // pred_check_branch
        %133 = sbr.rel (%p131) target = $region24
      $region23: #{tpu_custom_call.1} parent=5 // pred_region
        // Predicated region
        $region25: #{tpu_custom_call.1} parent=23 // pred_check
          %p134 = pneg %p35
        $region26: #{tpu_custom_call.1} parent=23 // pred_check_branch
          %136 = sbr.rel (%p134) target = $region28
        $region27: #{tpu_custom_call.1} parent=23 // pred_region
          %s137 = sand.u32 %s25, 1
          %s138 = scalar_lea.sflag [#allocation3], %s137
          %s139 = sand.u32 %s25, 1
          %s140 = smul.addr %s139, 64
          %s141 = scalar_lea.vmem [#allocation2], %s140
          %s142 = smul.u32 4, %s15
          %s144 = ssub.s32 1024, 1024
          %145 = vsyncadd %s138, %s144
          %s146 = smul.addr %s142, 2
          %s147 = smul.addr %s146, 128
          %s148 = scalar_lea.hbm %s0, %s147
          %s149 = sshll.u32 %s141, 4
          %s150 = int_to_ptr.vmem [resolvable:$true] %s149
          %155 = dma.hbm_to_vmem [thread:$0]  %s148, 1024, %s150, %s138, 128, 128, 8
        $region28: #{tpu_custom_call.1} parent=23 // pred_fallthru
          _
      $region24: #{tpu_custom_call.1} parent=5 // pred_fallthru
        _
      %p156 = scmp.le.s32.totalorder 1, %s15
      %p157 = scmp.lt.s32.totalorder %s15, 3
      %p158 = pnand %p156, %p157
      %p159 = pneg %p158
      // Predicated region
      $region29: #{tpu_custom_call.1} parent=5 // pred_check
        _
      $region30: #{tpu_custom_call.1} parent=5 // pred_check_branch
        %161 = sbr.rel (%p158) target = $region32
      $region31: #{tpu_custom_call.1} parent=5 // pred_region
        %s162 = ssub.s32 %s15, 1
        %s163 = sand.u32 %s28, 1
        %s164 = scalar_lea.sflag [#allocation3], %s163
        %s165 = sand.u32 %s28, 1
        %s166 = smul.addr %s165, 64
        %s167 = scalar_lea.vmem [#allocation2], %s166
        // Predicated region
        $region33: #{tpu_custom_call.1} parent=31 // pred_check
          %p168 = pneg %p41
        $region34: #{tpu_custom_call.1} parent=31 // pred_check_branch
          %170 = sbr.rel (%p168) target = $region36
        $region35: #{tpu_custom_call.1} parent=31 // pred_region
          %171 = dma.done %s164, 1024
        $region36: #{tpu_custom_call.1} parent=31 // pred_fallthru
          _
        %s172 = sand.u32 %s28, 1
        %s173 = scalar_lea.sflag [#allocation3], %s172
        %s174 = sand.u32 %s28, 1
        %s175 = smul.addr %s174, 64
        %s176 = scalar_lea.vmem [#allocation2], %s175
        %p177 = pneg %p41
        %p178 = pneg %p38
        %p179 = pneg %p62
        %p180 = pneg %p59
        %p181 = pneg %p83
        %p182 = pneg %p80
        %p183 = pneg %p109
        %p184 = pneg %p106
        %s185 = sand.u32 %s96, 1
        %s186 = scalar_lea.sflag [#allocation4], %s185
        %s187 = sand.u32 %s96, 1
        %s188 = smul.addr %s187, 128
        %s189 = scalar_lea.vmem [#allocation5], %s188
        %s190 = smul.u32 4, %s20
        %s191 = smul.u32 4, %s20
        %v192 = vld [vmem:[%s167] sm:$0xff]
        %v193 = vld [vmem:[%s167 + $0x8] sm:$0xff]
        %v194 = vld [vmem:[%s167 + $0x10] sm:$0xff]
        %v195 = vld [vmem:[%s167 + $0x18] sm:$0xff]
        %v196 = vld [vmem:[%s167 + $0x20] sm:$0xff]
        %v197 = vld [vmem:[%s167 + $0x28] sm:$0xff]
        %v198 = vld [vmem:[%s167 + $0x30] sm:$0xff]
        %v199 = vld [vmem:[%s167 + $0x38] sm:$0xff]
        %v200 = vld [vmem:[%s2] sm:$0xff]
        %v201 = vld [vmem:[%s2 + $0x8] sm:$0xff]
        %vm202 = vcmask 130048
        %v204 = vsel %vm202, %v192, 0
        %v207 = vsel %vm202, %v193, 0
        %v210 = vsel %vm202, %v194, 0
        %v213 = vsel %vm202, %v195, 0
        %v216 = vsel %vm202, %v196, 0
        %v219 = vsel %vm202, %v197, 0
        %v222 = vsel %vm202, %v198, 0
        %v225 = vsel %vm202, %v199, 0
        %227 = vmatprep.subr.mxu0 0.0
        %228 = vmatpush1.msra.mxu0 0.0
        %229 = vmatprep.subr.mxu0 0.0
        %230 = vmatpush1.msra.mxu0 0.0
        %231 = vmatprep.subr.mxu0 0.0
        %232 = vmatpush1.msra.mxu0 0.0
        %233 = vmatprep.subr.mxu0 0.0
        %234 = vmatpush1.msra.mxu0 0.0
        %235 = vmatprep.subr.mxu0 0.0
        %236 = vmatpush1.msra.mxu0 0.0
        %237 = vmatprep.subr.mxu0 0.0
        %238 = vmatpush1.msra.mxu0 0.0
        %239 = vmatprep.subr.mxu0 0.0
        %240 = vmatpush1.msra.mxu0 0.0
        %241 = vmatprep.subr.mxu0 0.0
        %242 = vmatpush1.msra.mxu0 0.0
        %243 = vmatprep.subr.mxu0 0.0
        %244 = vmatpush1.msra.mxu0 0.0
        %245 = vmatprep.subr.mxu0 0.0
        %246 = vmatpush1.msra.mxu0 0.0
        %247 = vmatprep.subr.mxu0 0.0
        %248 = vmatpush1.msra.mxu0 0.0
        %249 = vmatprep.subr.mxu0 0.0
        %250 = vmatpush1.msra.mxu0 0.0
        %251 = vmatprep.subr.mxu0 0.0
        %252 = vmatpush1.msra.mxu0 0.0
        %253 = vmatprep.subr.mxu0 0.0
        %254 = vmatpush1.msra.mxu0 0.0
        %255 = vmatprep.subr.mxu0 0.0
        %256 = vmatpush1.msra.mxu0 %v201
        %257 = vmatprep.subr.mxu0 0.0
        %258 = vmatpush1.msra.mxu0 %v200
        %259 = vmatprep.subr.mxu0 0.0
        %260 = vmatpush2.msra.mxu0 0.0
        %261 = vmatprep.subr.mxu0 0.0
        %262 = vmatpush2.msra.mxu0 0.0
        %263 = vmatprep.subr.mxu0 0.0
        %264 = vmatpush2.msra.mxu0 0.0
        %265 = vmatprep.subr.mxu0 0.0
        %266 = vmatpush2.msra.mxu0 0.0
        %267 = vmatprep.subr.mxu0 0.0
        %268 = vmatpush2.msra.mxu0 0.0
        %269 = vmatprep.subr.mxu0 0.0
        %270 = vmatpush2.msra.mxu0 0.0
        %271 = vmatprep.subr.mxu0 0.0
        %272 = vmatpush2.msra.mxu0 0.0
        %273 = vmatprep.subr.mxu0 0.0
        %274 = vmatpush2.msra.mxu0 0.0
        %275 = vmatprep.subr.mxu0 0.0
        %276 = vmatpush2.msra.mxu0 0.0
        %277 = vmatprep.subr.mxu0 0.0
        %278 = vmatpush2.msra.mxu0 0.0
        %279 = vmatprep.subr.mxu0 0.0
        %280 = vmatpush2.msra.mxu0 0.0
        %281 = vmatprep.subr.mxu0 0.0
        %282 = vmatpush2.msra.mxu0 0.0
        %283 = vmatprep.subr.mxu0 0.0
        %284 = vmatpush2.msra.mxu0 0.0
        %285 = vmatprep.subr.mxu0 0.0
        %286 = vmatpush2.msra.mxu0 0.0
        %287 = vmatprep.subr.mxu0 0.0
        %288 = vmatpush2.msra.mxu0 0.0
        %289 = vmatprep.subr.mxu0 0.0
        %290 = vmatpush2.msra.mxu0 0.0
        %291 = vmatprep.mubr.f32.mxu0 0.0
        %292 = vmatmul.mubr.f32.gmra.mxu0 %v204
        %v293 = vpop.f32.mrf.mxu0
        %v294 = vadd.f32 0.0, %v293
        %v295 = vpop.f32.mrf.mxu0
        %296 = vmatprep.mubr.f32.mxu0 0.0
        %297 = vmatmul.mubr.f32.gmra.mxu0 %v207
        %v298 = vpop.f32.mrf.mxu0
        %v299 = vadd.f32 0.0, %v298
        %v300 = vpop.f32.mrf.mxu0
        %301 = vmatprep.mubr.f32.mxu0 0.0
        %302 = vmatmul.mubr.f32.gmra.mxu0 %v210
        %v303 = vpop.f32.mrf.mxu0
        %v304 = vadd.f32 0.0, %v303
        %v305 = vpop.f32.mrf.mxu0
        %306 = vmatprep.mubr.f32.mxu0 0.0
        %307 = vmatmul.mubr.f32.gmra.mxu0 %v213
        %v308 = vpop.f32.mrf.mxu0
        %v309 = vadd.f32 0.0, %v308
        %v310 = vpop.f32.mrf.mxu0
        %311 = vmatprep.mubr.f32.mxu0 0.0
        %312 = vmatmul.mubr.f32.gmra.mxu0 %v216
        %v313 = vpop.f32.mrf.mxu0
        %v314 = vadd.f32 0.0, %v313
        %v315 = vpop.f32.mrf.mxu0
        %316 = vmatprep.mubr.f32.mxu0 0.0
        %317 = vmatmul.mubr.f32.gmra.mxu0 %v219
        %v318 = vpop.f32.mrf.mxu0
        %v319 = vadd.f32 0.0, %v318
        %v320 = vpop.f32.mrf.mxu0
        %321 = vmatprep.mubr.f32.mxu0 0.0
        %322 = vmatmul.mubr.f32.gmra.mxu0 %v222
        %v323 = vpop.f32.mrf.mxu0
        %v324 = vadd.f32 0.0, %v323
        %v325 = vpop.f32.mrf.mxu0
        %326 = vmatprep.mubr.f32.mxu0 0.0
        %327 = vmatmul.mubr.f32.gmra.mxu0 %v225
        %v328 = vpop.f32.mrf.mxu0
        %v329 = vadd.f32 0.0, %v328
        %v330 = vpop.f32.mrf.mxu0
        %331 = vdwg.mxu0
        %v332 = vld [vmem:[%s1] sm:$0xff]
        %v333 = vld [vmem:[%s1 + $0x8] sm:$0xff]
        %v334 = vld [vmem:[%s1 + $0x10] sm:$0xff]
        %v335 = vld [vmem:[%s1 + $0x18] sm:$0xff]
        %v337 = vsel %vm202, %v332, 0
        %v340 = vsel %vm202, %v333, 0
        %v343 = vsel %vm202, %v334, 0
        %v346 = vsel %vm202, %v335, 0
        %348 = vmatprep.subr.mxu0 0.0
        %349 = vmatpush1.msra.mxu0 0.0
        %350 = vmatprep.subr.mxu0 0.0
        %351 = vmatpush1.msra.mxu0 0.0
        %352 = vmatprep.subr.mxu0 0.0
        %353 = vmatpush1.msra.mxu0 0.0
        %354 = vmatprep.subr.mxu0 0.0
        %355 = vmatpush1.msra.mxu0 0.0
        %356 = vmatprep.subr.mxu0 0.0
        %357 = vmatpush1.msra.mxu0 0.0
        %358 = vmatprep.subr.mxu0 0.0
        %359 = vmatpush1.msra.mxu0 0.0
        %360 = vmatprep.subr.mxu0 0.0
        %361 = vmatpush1.msra.mxu0 0.0
        %362 = vmatprep.subr.mxu0 0.0
        %363 = vmatpush1.msra.mxu0 0.0
        %364 = vmatprep.subr.mxu0 0.0
        %365 = vmatpush1.msra.mxu0 0.0
        %366 = vmatprep.subr.mxu0 0.0
        %367 = vmatpush1.msra.mxu0 0.0
        %368 = vmatprep.subr.mxu0 0.0
        %369 = vmatpush1.msra.mxu0 0.0
        %370 = vmatprep.subr.mxu0 0.0
        %371 = vmatpush1.msra.mxu0 0.0
        %372 = vmatprep.subr.mxu0 0.0
        %373 = vmatpush1.msra.mxu0 0.0
        %374 = vmatprep.subr.mxu0 0.0
        %375 = vmatpush1.msra.mxu0 0.0
        %376 = vmatprep.subr.mxu0 0.0
        %377 = vmatpush1.msra.mxu0 %v299
        %378 = vmatprep.subr.mxu0 0.0
        %379 = vmatpush1.msra.mxu0 %v294
        %380 = vmatprep.subr.mxu0 0.0
        %381 = vmatpush2.msra.mxu0 0.0
        %382 = vmatprep.subr.mxu0 0.0
        %383 = vmatpush2.msra.mxu0 0.0
        %384 = vmatprep.subr.mxu0 0.0
        %385 = vmatpush2.msra.mxu0 0.0
        %386 = vmatprep.subr.mxu0 0.0
        %387 = vmatpush2.msra.mxu0 0.0
        %388 = vmatprep.subr.mxu0 0.0
        %389 = vmatpush2.msra.mxu0 0.0
        %390 = vmatprep.subr.mxu0 0.0
        %391 = vmatpush2.msra.mxu0 0.0
        %392 = vmatprep.subr.mxu0 0.0
        %393 = vmatpush2.msra.mxu0 0.0
        %394 = vmatprep.subr.mxu0 0.0
        %395 = vmatpush2.msra.mxu0 0.0
        %396 = vmatprep.subr.mxu0 0.0
        %397 = vmatpush2.msra.mxu0 0.0
        %398 = vmatprep.subr.mxu0 0.0
        %399 = vmatpush2.msra.mxu0 0.0
        %400 = vmatprep.subr.mxu0 0.0
        %401 = vmatpush2.msra.mxu0 0.0
        %402 = vmatprep.subr.mxu0 0.0
        %403 = vmatpush2.msra.mxu0 0.0
        %404 = vmatprep.subr.mxu0 0.0
        %405 = vmatpush2.msra.mxu0 0.0
        %406 = vmatprep.subr.mxu0 0.0
        %407 = vmatpush2.msra.mxu0 0.0
        %408 = vmatprep.subr.mxu0 0.0
        %409 = vmatpush2.msra.mxu0 0.0
        %410 = vmatprep.subr.mxu0 0.0
        %411 = vmatpush2.msra.mxu0 0.0
        %412 = vmatprep.mubr.f32.mxu0 0.0
        %413 = vmatmul.mubr.f32.gmra.mxu0 %v337
        %v414 = vpop.f32.mrf.mxu0
        %v415 = vadd.f32 0.0, %v414
        %v416 = vpop.f32.mrf.mxu0
        %417 = vmatprep.mubr.f32.mxu0 0.0
        %418 = vmatmul.mubr.f32.gmra.mxu0 %v340
        %v419 = vpop.f32.mrf.mxu0
        %v420 = vadd.f32 0.0, %v419
        %v421 = vpop.f32.mrf.mxu0
        %422 = vmatprep.mubr.f32.mxu0 0.0
        %423 = vmatmul.mubr.f32.gmra.mxu0 %v343
        %v424 = vpop.f32.mrf.mxu0
        %v425 = vadd.f32 0.0, %v424
        %v426 = vpop.f32.mrf.mxu0
        %427 = vmatprep.mubr.f32.mxu0 0.0
        %428 = vmatmul.mubr.f32.gmra.mxu0 %v346
        %v429 = vpop.f32.mrf.mxu0
        %v430 = vadd.f32 0.0, %v429
        %v431 = vpop.f32.mrf.mxu0
        %432 = vdwg.mxu0
        %433 = vmatprep.subr.mxu0 0.0
        %434 = vmatpush1.msra.mxu0 0.0
        %435 = vmatprep.subr.mxu0 0.0
        %436 = vmatpush1.msra.mxu0 0.0
        %437 = vmatprep.subr.mxu0 0.0
        %438 = vmatpush1.msra.mxu0 0.0
        %439 = vmatprep.subr.mxu0 0.0
        %440 = vmatpush1.msra.mxu0 0.0
        %441 = vmatprep.subr.mxu0 0.0
        %442 = vmatpush1.msra.mxu0 0.0
        %443 = vmatprep.subr.mxu0 0.0
        %444 = vmatpush1.msra.mxu0 0.0
        %445 = vmatprep.subr.mxu0 0.0
        %446 = vmatpush1.msra.mxu0 0.0
        %447 = vmatprep.subr.mxu0 0.0
        %448 = vmatpush1.msra.mxu0 0.0
        %449 = vmatprep.subr.mxu0 0.0
        %450 = vmatpush1.msra.mxu0 0.0
        %451 = vmatprep.subr.mxu0 0.0
        %452 = vmatpush1.msra.mxu0 0.0
        %453 = vmatprep.subr.mxu0 0.0
        %454 = vmatpush1.msra.mxu0 0.0
        %455 = vmatprep.subr.mxu0 0.0
        %456 = vmatpush1.msra.mxu0 0.0
        %457 = vmatprep.subr.mxu0 0.0
        %458 = vmatpush1.msra.mxu0 0.0
        %459 = vmatprep.subr.mxu0 0.0
        %460 = vmatpush1.msra.mxu0 0.0
        %461 = vmatprep.subr.mxu0 0.0
        %462 = vmatpush1.msra.mxu0 %v309
        %463 = vmatprep.subr.mxu0 0.0
        %464 = vmatpush1.msra.mxu0 %v304
        %465 = vmatprep.subr.mxu0 0.0
        %466 = vmatpush2.msra.mxu0 0.0
        %467 = vmatprep.subr.mxu0 0.0
        %468 = vmatpush2.msra.mxu0 0.0
        %469 = vmatprep.subr.mxu0 0.0
        %470 = vmatpush2.msra.mxu0 0.0
        %471 = vmatprep.subr.mxu0 0.0
        %472 = vmatpush2.msra.mxu0 0.0
        %473 = vmatprep.subr.mxu0 0.0
        %474 = vmatpush2.msra.mxu0 0.0
        %475 = vmatprep.subr.mxu0 0.0
        %476 = vmatpush2.msra.mxu0 0.0
        %477 = vmatprep.subr.mxu0 0.0
        %478 = vmatpush2.msra.mxu0 0.0
        %479 = vmatprep.subr.mxu0 0.0
        %480 = vmatpush2.msra.mxu0 0.0
        %481 = vmatprep.subr.mxu0 0.0
        %482 = vmatpush2.msra.mxu0 0.0
        %483 = vmatprep.subr.mxu0 0.0
        %484 = vmatpush2.msra.mxu0 0.0
        %485 = vmatprep.subr.mxu0 0.0
        %486 = vmatpush2.msra.mxu0 0.0
        %487 = vmatprep.subr.mxu0 0.0
        %488 = vmatpush2.msra.mxu0 0.0
        %489 = vmatprep.subr.mxu0 0.0
        %490 = vmatpush2.msra.mxu0 0.0
        %491 = vmatprep.subr.mxu0 0.0
        %492 = vmatpush2.msra.mxu0 0.0
        %493 = vmatprep.subr.mxu0 0.0
        %494 = vmatpush2.msra.mxu0 0.0
        %495 = vmatprep.subr.mxu0 0.0
        %496 = vmatpush2.msra.mxu0 0.0
        %497 = vmatprep.mubr.f32.mxu0 0.0
        %498 = vmatmul.mubr.f32.gmra.mxu0 %v337
        %v499 = vpop.f32.mrf.mxu0
        %v500 = vadd.f32 0.0, %v499
        %v501 = vpop.f32.mrf.mxu0
        %502 = vmatprep.mubr.f32.mxu0 0.0
        %503 = vmatmul.mubr.f32.gmra.mxu0 %v340
        %v504 = vpop.f32.mrf.mxu0
        %v505 = vadd.f32 0.0, %v504
        %v506 = vpop.f32.mrf.mxu0
        %507 = vmatprep.mubr.f32.mxu0 0.0
        %508 = vmatmul.mubr.f32.gmra.mxu0 %v343
        %v509 = vpop.f32.mrf.mxu0
        %v510 = vadd.f32 0.0, %v509
        %v511 = vpop.f32.mrf.mxu0
        %512 = vmatprep.mubr.f32.mxu0 0.0
        %513 = vmatmul.mubr.f32.gmra.mxu0 %v346
        %v514 = vpop.f32.mrf.mxu0
        %v515 = vadd.f32 0.0, %v514
        %v516 = vpop.f32.mrf.mxu0
        %517 = vdwg.mxu0
        %518 = vmatprep.subr.mxu0 0.0
        %519 = vmatpush1.msra.mxu0 0.0
        %520 = vmatprep.subr.mxu0 0.0
        %521 = vmatpush1.msra.mxu0 0.0
        %522 = vmatprep.subr.mxu0 0.0
        %523 = vmatpush1.msra.mxu0 0.0
        %524 = vmatprep.subr.mxu0 0.0
        %525 = vmatpush1.msra.mxu0 0.0
        %526 = vmatprep.subr.mxu0 0.0
        %527 = vmatpush1.msra.mxu0 0.0
        %528 = vmatprep.subr.mxu0 0.0
        %529 = vmatpush1.msra.mxu0 0.0
        %530 = vmatprep.subr.mxu0 0.0
        %531 = vmatpush1.msra.mxu0 0.0
        %532 = vmatprep.subr.mxu0 0.0
        %533 = vmatpush1.msra.mxu0 0.0
        %534 = vmatprep.subr.mxu0 0.0
        %535 = vmatpush1.msra.mxu0 0.0
        %536 = vmatprep.subr.mxu0 0.0
        %537 = vmatpush1.msra.mxu0 0.0
        %538 = vmatprep.subr.mxu0 0.0
        %539 = vmatpush1.msra.mxu0 0.0
        %540 = vmatprep.subr.mxu0 0.0
        %541 = vmatpush1.msra.mxu0 0.0
        %542 = vmatprep.subr.mxu0 0.0
        %543 = vmatpush1.msra.mxu0 0.0
        %544 = vmatprep.subr.mxu0 0.0
        %545 = vmatpush1.msra.mxu0 0.0
        %546 = vmatprep.subr.mxu0 0.0
        %547 = vmatpush1.msra.mxu0 %v319
        %548 = vmatprep.subr.mxu0 0.0
        %549 = vmatpush1.msra.mxu0 %v314
        %550 = vmatprep.subr.mxu0 0.0
        %551 = vmatpush2.msra.mxu0 0.0
        %552 = vmatprep.subr.mxu0 0.0
        %553 = vmatpush2.msra.mxu0 0.0
        %554 = vmatprep.subr.mxu0 0.0
        %555 = vmatpush2.msra.mxu0 0.0
        %556 = vmatprep.subr.mxu0 0.0
        %557 = vmatpush2.msra.mxu0 0.0
        %558 = vmatprep.subr.mxu0 0.0
        %559 = vmatpush2.msra.mxu0 0.0
        %560 = vmatprep.subr.mxu0 0.0
        %561 = vmatpush2.msra.mxu0 0.0
        %562 = vmatprep.subr.mxu0 0.0
        %563 = vmatpush2.msra.mxu0 0.0
        %564 = vmatprep.subr.mxu0 0.0
        %565 = vmatpush2.msra.mxu0 0.0
        %566 = vmatprep.subr.mxu0 0.0
        %567 = vmatpush2.msra.mxu0 0.0
        %568 = vmatprep.subr.mxu0 0.0
        %569 = vmatpush2.msra.mxu0 0.0
        %570 = vmatprep.subr.mxu0 0.0
        %571 = vmatpush2.msra.mxu0 0.0
        %572 = vmatprep.subr.mxu0 0.0
        %573 = vmatpush2.msra.mxu0 0.0
        %574 = vmatprep.subr.mxu0 0.0
        %575 = vmatpush2.msra.mxu0 0.0
        %576 = vmatprep.subr.mxu0 0.0
        %577 = vmatpush2.msra.mxu0 0.0
        %578 = vmatprep.subr.mxu0 0.0
        %579 = vmatpush2.msra.mxu0 0.0
        %580 = vmatprep.subr.mxu0 0.0
        %581 = vmatpush2.msra.mxu0 0.0
        %582 = vmatprep.mubr.f32.mxu0 0.0
        %583 = vmatmul.mubr.f32.gmra.mxu0 %v337
        %v584 = vpop.f32.mrf.mxu0
        %v585 = vadd.f32 0.0, %v584
        %v586 = vpop.f32.mrf.mxu0
        %587 = vmatprep.mubr.f32.mxu0 0.0
        %588 = vmatmul.mubr.f32.gmra.mxu0 %v340
        %v589 = vpop.f32.mrf.mxu0
        %v590 = vadd.f32 0.0, %v589
        %v591 = vpop.f32.mrf.mxu0
        %592 = vmatprep.mubr.f32.mxu0 0.0
        %593 = vmatmul.mubr.f32.gmra.mxu0 %v343
        %v594 = vpop.f32.mrf.mxu0
        %v595 = vadd.f32 0.0, %v594
        %v596 = vpop.f32.mrf.mxu0
        %597 = vmatprep.mubr.f32.mxu0 0.0
        %598 = vmatmul.mubr.f32.gmra.mxu0 %v346
        %v599 = vpop.f32.mrf.mxu0
        %v600 = vadd.f32 0.0, %v599
        %v601 = vpop.f32.mrf.mxu0
        %602 = vdwg.mxu0
        %603 = vmatprep.subr.mxu0 0.0
        %604 = vmatpush1.msra.mxu0 0.0
        %605 = vmatprep.subr.mxu0 0.0
        %606 = vmatpush1.msra.mxu0 0.0
        %607 = vmatprep.subr.mxu0 0.0
        %608 = vmatpush1.msra.mxu0 0.0
        %609 = vmatprep.subr.mxu0 0.0
        %610 = vmatpush1.msra.mxu0 0.0
        %611 = vmatprep.subr.mxu0 0.0
        %612 = vmatpush1.msra.mxu0 0.0
        %613 = vmatprep.subr.mxu0 0.0
        %614 = vmatpush1.msra.mxu0 0.0
        %615 = vmatprep.subr.mxu0 0.0
        %616 = vmatpush1.msra.mxu0 0.0
        %617 = vmatprep.subr.mxu0 0.0
        %618 = vmatpush1.msra.mxu0 0.0
        %619 = vmatprep.subr.mxu0 0.0
        %620 = vmatpush1.msra.mxu0 0.0
        %621 = vmatprep.subr.mxu0 0.0
        %622 = vmatpush1.msra.mxu0 0.0
        %623 = vmatprep.subr.mxu0 0.0
        %624 = vmatpush1.msra.mxu0 0.0
        %625 = vmatprep.subr.mxu0 0.0
        %626 = vmatpush1.msra.mxu0 0.0
        %627 = vmatprep.subr.mxu0 0.0
        %628 = vmatpush1.msra.mxu0 0.0
        %629 = vmatprep.subr.mxu0 0.0
        %630 = vmatpush1.msra.mxu0 0.0
        %631 = vmatprep.subr.mxu0 0.0
        %632 = vmatpush1.msra.mxu0 %v329
        %633 = vmatprep.subr.mxu0 0.0
        %634 = vmatpush1.msra.mxu0 %v324
        %635 = vmatprep.subr.mxu0 0.0
        %636 = vmatpush2.msra.mxu0 0.0
        %637 = vmatprep.subr.mxu0 0.0
        %638 = vmatpush2.msra.mxu0 0.0
        %639 = vmatprep.subr.mxu0 0.0
        %640 = vmatpush2.msra.mxu0 0.0
        %641 = vmatprep.subr.mxu0 0.0
        %642 = vmatpush2.msra.mxu0 0.0
        %643 = vmatprep.subr.mxu0 0.0
        %644 = vmatpush2.msra.mxu0 0.0
        %645 = vmatprep.subr.mxu0 0.0
        %646 = vmatpush2.msra.mxu0 0.0
        %647 = vmatprep.subr.mxu0 0.0
        %648 = vmatpush2.msra.mxu0 0.0
        %649 = vmatprep.subr.mxu0 0.0
        %650 = vmatpush2.msra.mxu0 0.0
        %651 = vmatprep.subr.mxu0 0.0
        %652 = vmatpush2.msra.mxu0 0.0
        %653 = vmatprep.subr.mxu0 0.0
        %654 = vmatpush2.msra.mxu0 0.0
        %655 = vmatprep.subr.mxu0 0.0
        %656 = vmatpush2.msra.mxu0 0.0
        %657 = vmatprep.subr.mxu0 0.0
        %658 = vmatpush2.msra.mxu0 0.0
        %659 = vmatprep.subr.mxu0 0.0
        %660 = vmatpush2.msra.mxu0 0.0
        %661 = vmatprep.subr.mxu0 0.0
        %662 = vmatpush2.msra.mxu0 0.0
        %663 = vmatprep.subr.mxu0 0.0
        %664 = vmatpush2.msra.mxu0 0.0
        %665 = vmatprep.subr.mxu0 0.0
        %666 = vmatpush2.msra.mxu0 0.0
        %667 = vmatprep.mubr.f32.mxu0 0.0
        %668 = vmatmul.mubr.f32.gmra.mxu0 %v337
        %v669 = vpop.f32.mrf.mxu0
        %v670 = vadd.f32 0.0, %v669
        %v671 = vpop.f32.mrf.mxu0
        %672 = vmatprep.mubr.f32.mxu0 0.0
        %673 = vmatmul.mubr.f32.gmra.mxu0 %v340
        %v674 = vpop.f32.mrf.mxu0
        %v675 = vadd.f32 0.0, %v674
        %v676 = vpop.f32.mrf.mxu0
        %677 = vmatprep.mubr.f32.mxu0 0.0
        %678 = vmatmul.mubr.f32.gmra.mxu0 %v343
        %v679 = vpop.f32.mrf.mxu0
        %v680 = vadd.f32 0.0, %v679
        %v681 = vpop.f32.mrf.mxu0
        %682 = vmatprep.mubr.f32.mxu0 0.0
        %683 = vmatmul.mubr.f32.gmra.mxu0 %v346
        %v684 = vpop.f32.mrf.mxu0
        %v685 = vadd.f32 0.0, %v684
        %v686 = vpop.f32.mrf.mxu0
        %687 = vdwg.mxu0
        %688 = vst [vmem:[%s189] sm:$0xff] %v415
        %689 = vst [vmem:[%s189 + $0x8] sm:$0xff] %v420
        %690 = vst [vmem:[%s189 + $0x10] sm:$0xff] %v425
        %691 = vst [vmem:[%s189 + $0x18] sm:$0xff] %v430
        %692 = vst [vmem:[%s189 + $0x20] sm:$0xff] %v500
        %693 = vst [vmem:[%s189 + $0x28] sm:$0xff] %v505
        %694 = vst [vmem:[%s189 + $0x30] sm:$0xff] %v510
        %695 = vst [vmem:[%s189 + $0x38] sm:$0xff] %v515
        %696 = vst [vmem:[%s189 + $0x40] sm:$0xff] %v585
        %697 = vst [vmem:[%s189 + $0x48] sm:$0xff] %v590
        %698 = vst [vmem:[%s189 + $0x50] sm:$0xff] %v595
        %699 = vst [vmem:[%s189 + $0x58] sm:$0xff] %v600
        %700 = vst [vmem:[%s189 + $0x60] sm:$0xff] %v670
        %701 = vst [vmem:[%s189 + $0x68] sm:$0xff] %v675
        %702 = vst [vmem:[%s189 + $0x70] sm:$0xff] %v680
        %703 = vst [vmem:[%s189 + $0x78] sm:$0xff] %v685
        %s704 = sand.u32 %s96, 1
        %s705 = scalar_lea.sflag [#allocation4], %s704
        %s706 = sand.u32 %s96, 1
        %s707 = smul.addr %s706, 128
        %s708 = scalar_lea.vmem [#allocation5], %s707
        // Predicated region
        $region37: #{tpu_custom_call.1} parent=31 // pred_check
          %p709 = pneg %p106
        $region38: #{tpu_custom_call.1} parent=31 // pred_check_branch
          %711 = sbr.rel (%p709) target = $region40
        $region39: #{tpu_custom_call.1} parent=31 // pred_region
          %s712 = smul.u32 4, %s20
          %s714 = ssub.s32 2048, 2048
          %715 = vsyncadd %s705, %s714
          %s716 = smul.addr %s712, 4
          %s717 = smul.addr %s716, 128
          %s718 = scalar_lea.hbm %s3, %s717
          %s719 = sshll.u32 %s708, 4
          %s720 = int_to_ptr.vmem [resolvable:$true] %s719
          %725 = dma.vmem_to_hbm [thread:$0]  %s720, 2048, %s718, %s705, 128, 128, 8
        $region40: #{tpu_custom_call.1} parent=31 // pred_fallthru
          _
      $region32: #{tpu_custom_call.1} parent=5 // pred_fallthru
        _
      %p726 = scmp.le.s32.totalorder 2, %s15
      // Predicated region
      $region41: #{tpu_custom_call.1} parent=5 // pred_check
        %p727 = pneg %p726
      $region42: #{tpu_custom_call.1} parent=5 // pred_check_branch
        %729 = sbr.rel (%p727) target = $region44
      $region43: #{tpu_custom_call.1} parent=5 // pred_region
        %s730 = ssub.s32 %s15, 2
        // Predicated region
        $region45: #{tpu_custom_call.1} parent=43 // pred_check
          %p731 = pneg %p112
        $region46: #{tpu_custom_call.1} parent=43 // pred_check_branch
          %733 = sbr.rel (%p731) target = $region48
        $region47: #{tpu_custom_call.1} parent=43 // pred_region
          %s734 = sand.u32 %s97, 1
          %s735 = scalar_lea.sflag [#allocation4], %s734
          %s736 = sand.u32 %s97, 1
          %s737 = smul.addr %s736, 128
          %s738 = scalar_lea.vmem [#allocation5], %s737
          %739 = dma.done %s735, 2048
        $region48: #{tpu_custom_call.1} parent=43 // pred_fallthru
          _
      $region44: #{tpu_custom_call.1} parent=5 // pred_fallthru
        _
    $region6: #{tpu_custom_call.1} parent=1 // loop_footer
      %s19 = sadd.s32 1, %s15
    $region7: #{tpu_custom_call.1} parent=1 // loop_footer_branch
      %14 = sbr.rel target = $region3
    $region8: #{tpu_custom_call.1} parent=1 // loop_exit
      _
    %740 = vsyncpa [#allocation3], 1
    %s741 = scalar_lea.sflag [#allocation3], 1
    %742 = vsyncpa %s741, 1
    %743 = vsyncpa [#allocation4], 1
    %s744 = scalar_lea.sflag [#allocation4], 1
    %745 = vsyncpa %s744, 1

</llo_original>
